<compile_context>
chip_gen: v7x
topology: tpu7x:2x2x1
jax: 0.10.0
libtpu: 0.0.40
codegen_flags: <defaults>
</compile_context>

<pallas_src>
import functools
import math

import jax
import jax.numpy as jnp
from jax.experimental import pallas as pl
from jax.experimental.pallas import tpu as pltpu

EPS = 1e-5
K = 5  # ConvTranspose2d kernel_size


# --------------------------------------------------------------------------
# pltpu.roll sign-convention probe (run once, cached).  Guarantees the tap
# shifts below are aligned regardless of the rotate direction convention.
# --------------------------------------------------------------------------
@functools.lru_cache(maxsize=None)
def _roll_sign():
    def probe(x_ref, o_ref):
        o_ref[...] = pltpu.roll(x_ref[...], 1, 1)

    x = jnp.broadcast_to(jnp.arange(128, dtype=jnp.float32), (8, 128))
    out = pl.pallas_call(
        probe, out_shape=jax.ShapeDtypeStruct((8, 128), jnp.float32))(x)
    # jnp.roll convention: out[..., 0] == x[..., -1] == 127
    return 1 if float(out[0, 0]) == 127.0 else -1


# --------------------------------------------------------------------------
# Shared in-kernel conv: y[4*Cout, tile_m] from a (Cin, tile_m) input tile.
# 9 taps = 9 lane-rolls (XLU) * boundary mask (VPU) * small matmul (MXU).
# --------------------------------------------------------------------------
def _conv_taps(x_ref, w_ref, m_ref, img_w, tile_m, sign):
    x = x_ref[...]                                  # (Cin, tile_m) bf16
    y = None
    for dh in range(3):
        for dw in range(3):
            tap = dh * 3 + dw
            off = (dh - 1) * img_w + (dw - 1)       # source offset in flat (H, W)
            if off == 0:
                xs = x
            else:
                xs = pltpu.roll(x, (sign * -off) % tile_m, 1)
            if not (dh == 1 and dw == 1):
                xs = xs * m_ref[tap]                # (1, tile_m) 0/1 boundary mask
            part = jnp.dot(w_ref[tap], xs,
                           preferred_element_type=jnp.float32)
            y = part if y is None else y + part
    return y                                        # (4*Cout, tile_m) f32


def _stats_kernel(x_ref, w_ref, m_ref, mean_ref, sq_ref, *,
                  img_w, tile_m, sign):
    """Accumulate centered sum-of-squares per (phase, channel) row."""
    @pl.when(pl.program_id(1) == 0)
    def _():
        sq_ref[...] = jnp.zeros_like(sq_ref)

    y = _conv_taps(x_ref, w_ref, m_ref, img_w, tile_m, sign)
    d = y - mean_ref[...]                           # exact mean, f32
    sq_ref[...] += jnp.sum(d * d, axis=1, keepdims=True)


def _apply_kernel(x_ref, w_ref, m_ref, scale_ref, shift_ref, o_ref, *,
                  img_w, tile_m, sign):
    """Recompute conv (cheap, memory-bound) and apply fused BN + ReLU."""
    y = _conv_taps(x_ref, w_ref, m_ref, img_w, tile_m, sign)
    o_ref[...] = jnp.maximum(y * scale_ref[...] + shift_ref[...],
                             0.0).astype(o_ref.dtype)


# --------------------------------------------------------------------------
# VMEM-aware tile selection: whole images per tile, lane-dense (mult. of 128),
# sized against a budget that is safe for v7x's 64 MiB VMEM.
# --------------------------------------------------------------------------
def _pick_tile(hw, n_img, cin, phc, budget_bytes=12 << 20, max_tile=8192):
    # per-lane bytes: 2x-buffered bf16 x + 2x-buffered bf16 out + masks +
    # live f32 y temporaries (x2)
    per_col = 2 * cin * 2 + 2 * phc * 2 + 2 * 9 * 2 + 2 * phc * 4 + cin * 2
    k = max(1, min(budget_bytes // (per_col * hw), max_tile // hw))
    lane_k = 128 // math.gcd(hw, 128)       # images/tile needed for 128-lane mult.
    k = (k // lane_k) * lane_k if k >= lane_k else lane_k
    # don't tile far past the actual batch (avoid useless zero-padding)
    k = min(k, max(lane_k, -(-n_img // lane_k) * lane_k))
    # TODO(synk): for H*W too large to fit one image per tile, fall back to a
    # halo-DMA (pl.ANY + make_async_copy) row-tiled variant.
    return int(k) * hw


def decoder_block_forward(x, w_t, gamma, beta, *, images_per_tile=None):
    """x: (N, Cin, H, W) f32 NCHW; w_t: (Cin, Cout, 5, 5) ConvTranspose2d weight;
       gamma/beta: (Cout,) BatchNorm affine.  Returns (N, Cout, 2H, 2W) f32."""
    N, Cin, H, W = x.shape
    Cout = w_t.shape[1]
    Ho, Wo = 2 * H, 2 * W
    HW = H * W
    M = N * HW
    PHC = 4 * Cout
    sign = _roll_sign()

    if images_per_tile is not None:
        lane_k = 128 // math.gcd(HW, 128)
        k = -(-max(1, images_per_tile) // lane_k) * lane_k
        tile_m = k * HW
    else:
        tile_m = _pick_tile(HW, N, Cin, PHC)
    num_tiles = -(-M // tile_m)
    M_pad = num_tiles * tile_m

    # ---- combined 4-phase / 9-tap weights (tiny): w9[tap, phase*Cout+co, ci].
    # out[n,co,2i+py,2j+px] = sum_{dh,dw,ci} x[n,ci,i+dh-1,j+dw-1]
    #                         * Wt[ci,co, 4-2*dh+py, 4-2*dw+px]  (tap kept iff k<5)
    taps = []
    for dh in range(3):
        for dw in range(3):
            ph_rows = []
            for py in range(2):
                for px in range(2):
                    kh, kw = 4 - 2 * dh + py, 4 - 2 * dw + px
                    if kh < K and kw < K:
                        ph_rows.append(jnp.transpose(w_t[:, :, kh, kw]))
                    else:
                        ph_rows.append(jnp.zeros((Cout, Cin), w_t.dtype))
            taps.append(jnp.concatenate(ph_rows, axis=0))        # (PHC, Cin)
    w9f = jnp.stack(taps, axis=0).astype(jnp.float32)            # (9, PHC, Cin)
    w9b = w9f.astype(jnp.bfloat16)

    # ---- 1x bf16 channel-major input, M lane-dense, zero-padded to M_pad.
    xt = jnp.transpose(x.astype(jnp.bfloat16), (1, 0, 2, 3)).reshape(Cin, M)
    xt = jnp.pad(xt, ((0, 0), (0, M_pad - M)))

    # ---- per-tap boundary masks; tile-invariant because tile_m % HW == 0.
    pos = jnp.arange(tile_m, dtype=jnp.int32) % HW
    row, col = pos // W, pos % W
    ones = jnp.ones((tile_m,), jnp.bool_)
    row_ok = {0: row != 0, 1: ones, 2: row != H - 1}
    col_ok = {0: col != 0, 1: ones, 2: col != W - 1}
    masks = jnp.stack([row_ok[dh] & col_ok[dw]
                       for dh in range(3) for dw in range(3)])
    masks = masks.astype(jnp.bfloat16).reshape(9, 1, tile_m)

    # ---- exact per-channel conv mean in f32 (cheap: total minus edge strips).
    xf = x.astype(jnp.float32)
    tot = xf.sum(axis=(0, 2, 3))
    r0 = xf[:, :, 0, :].sum(axis=(0, 2));  rL = xf[:, :, H - 1, :].sum(axis=(0, 2))
    c0 = xf[:, :, :, 0].sum(axis=(0, 2));  cL = xf[:, :, :, W - 1].sum(axis=(0, 2))
    crn = {(0, 0): xf[:, :, H - 1, W - 1].sum(0),
           (0, 2): xf[:, :, H - 1, 0].sum(0),
           (2, 0): xf[:, :, 0, W - 1].sum(0),
           (2, 2): xf[:, :, 0, 0].sum(0)}
    rexc = {0: rL, 1: 0.0, 2: r0}
    cexc = {0: cL, 1: 0.0, 2: c0}
    tap_sums = jnp.stack([tot - rexc[dh] - cexc[dw] + crn.get((dh, dw), 0.0)
                          for dh in range(3) for dw in range(3)])   # (9, Cin)
    cnt = jnp.float32(N * Ho * Wo)
    s_phc = jnp.einsum('kpc,kc->p', w9f, tap_sums)                  # (PHC,)
    mean_c = s_phc.reshape(4, Cout).sum(axis=0) / cnt               # (Cout,)
    mean4 = jnp.tile(mean_c, 4).reshape(PHC, 1).astype(jnp.float32)

    # ---- pass 1: centered global sum-of-squares (2-way parallel on >= 4 tiles
    #      so both v7x TensorCores contribute; per-core partials added in f32).
    P = 2 if (num_tiles % 2 == 0 and num_tiles >= 4) else 1
    T = num_tiles // P
    sq = pl.pallas_call(
        functools.partial(_stats_kernel, img_w=W, tile_m=tile_m, sign=sign),
        out_shape=jax.ShapeDtypeStruct((P, PHC, 1), jnp.float32),
        grid=(P, T),
        in_specs=[pl.BlockSpec((Cin, tile_m), lambda p, t: (0, p * T + t)),
                  pl.BlockSpec((9, PHC, Cin), lambda p, t: (0, 0, 0)),
                  pl.BlockSpec((9, 1, tile_m), lambda p, t: (0, 0, 0)),
                  pl.BlockSpec((PHC, 1), lambda p, t: (0, 0))],
        out_specs=pl.BlockSpec((None, PHC, 1), lambda p, t: (p, 0, 0)),
        compiler_params=pltpu.CompilerParams(
            dimension_semantics=("parallel", "arbitrary"),
            vmem_limit_bytes=32 * 1024 * 1024),
    )(xt, w9b, masks, mean4)

    # ---- finalize: exact zero-pad correction, biased variance, fused BN.
    sq_tot = sq.sum(axis=0)[:, 0]                                   # (PHC,)
    sq_tot = sq_tot - jnp.float32(M_pad - M) * (mean4[:, 0] ** 2)   # pad cols give y==0
    var_c = jnp.maximum(sq_tot.reshape(4, Cout).sum(axis=0) / cnt, 0.0)
    inv = jax.lax.rsqrt(var_c + EPS)
    scale = gamma.astype(jnp.float32) * inv
    shift = beta.astype(jnp.float32) - mean_c * scale
    scale4 = jnp.tile(scale, 4).reshape(PHC, 1)
    shift4 = jnp.tile(shift, 4).reshape(PHC, 1)
    # TODO(synk): BatchNorm running-stat update (momentum=0.9) is a training
    # side effect on module buffers and is not part of the returned tensor.

    # ---- pass 2: conv recompute + BN + ReLU, bf16 out, fully parallel tiles.
    y = pl.pallas_call(
        functools.partial(_apply_kernel, img_w=W, tile_m=tile_m, sign=sign),
        out_shape=jax.ShapeDtypeStruct((PHC, M_pad), jnp.bfloat16),
        grid=(num_tiles,),
        in_specs=[pl.BlockSpec((Cin, tile_m), lambda t: (0, t)),
                  pl.BlockSpec((9, PHC, Cin), lambda t: (0, 0, 0)),
                  pl.BlockSpec((9, 1, tile_m), lambda t: (0, 0, 0)),
                  pl.BlockSpec((PHC, 1), lambda t: (0, 0)),
                  pl.BlockSpec((PHC, 1), lambda t: (0, 0))],
        out_specs=pl.BlockSpec((PHC, tile_m), lambda t: (0, t)),
        compiler_params=pltpu.CompilerParams(
            dimension_semantics=("parallel",),
            vmem_limit_bytes=32 * 1024 * 1024),
    )(xt, w9b, masks, scale4, shift4)

    # ---- pixel-shuffle epilogue (reads bf16, writes the final f32 NCHW).
    # TODO(synk): keep the phase-major (4*Cout, M) layout end-to-end if the
    # surrounding model allows, dropping this last transpose entirely.
    out = (y[:, :M].reshape(2, 2, Cout, N, H, W)
             .transpose(3, 2, 4, 0, 5, 1)
             .reshape(N, Cout, Ho, Wo)
             .astype(jnp.float32))
    return out


# --------------------------------------------------------------------------
# Pure-JAX f32 reference of the PyTorch forward semantics.
# --------------------------------------------------------------------------
def _reference(x, w_t, gamma, beta):
    conv = jax.lax.conv_general_dilated(
        x, jnp.flip(w_t, (2, 3)), window_strides=(1, 1),
        padding=((2, 3), (2, 3)), lhs_dilation=(2, 2),
        dimension_numbers=("NCHW", "IOHW", "NCHW"))
    mu = conv.mean(axis=(0, 2, 3), keepdims=True)
    var = ((conv - mu) ** 2).mean(axis=(0, 2, 3), keepdims=True)
    return jnp.maximum(
        (conv - mu) / jnp.sqrt(var + EPS) * gamma.reshape(1, -1, 1, 1)
        + beta.reshape(1, -1, 1, 1), 0.0)


if __name__ == "__main__":
    key = jax.random.PRNGKey(0)
    kw, kx2, kx3, kx4 = jax.random.split(key, 4)

    Cin, Cout, H, W = 4, 8, 16, 16
    fan = Cin * K * K
    w_t = (jax.random.uniform(kw, (Cin, Cout, K, K), jnp.float32, -1.0, 1.0)
           / jnp.sqrt(jnp.float32(fan)))
    gamma = jnp.linspace(0.5, 1.5, Cout, dtype=jnp.float32)
    beta = jnp.linspace(-0.2, 0.3, Cout, dtype=jnp.float32)

    x2 = jax.random.normal(kx2, (2, Cin, H, W), jnp.float32)
    x3 = jax.random.normal(kx3, (3, Cin, H, W), jnp.float32)
    x4 = jax.random.normal(kx4, (4, Cin, H, W), jnp.float32)

    cases = [
        (x2, 1),     # 2 tiles: sequential cross-tile stats accumulation
        (x2, None),  # auto tiling: single tile covers the batch
        (x4, 1),     # 4 tiles: 2-way parallel stats split (v7x 2-TC path)
        (x3, 2),     # M padded with a zero image: pad-correction path
    ]
    for xi, ipt in cases:
        out = jax.block_until_ready(
            decoder_block_forward(xi, w_t, gamma, beta, images_per_tile=ipt))
        ref = _reference(xi, w_t, gamma, beta)
        assert out.shape == ref.shape, (out.shape, ref.shape)
        err = float(jnp.max(jnp.abs(out - ref)))
        # bf16 MXU operands + bf16 output storage (BN math in f32)
        assert jnp.allclose(out, ref, atol=3e-2, rtol=3e-2), err
    print("KERNEL_OK")
</pallas_src>

<mosaic_0001>
module attributes {stable_mosaic.version = 11 : i64} {
  func.func @probe(%arg0: memref<8x128xf32, #tpu.memory_space<vmem>>, %arg1: memref<8x128xf32, #tpu.memory_space<vmem>>) attributes {dimension_semantics = [], scalar_prefetch = 0 : i64, scratch_operands = 0 : i64, tpu.core_type = #tpu.core_type<tc>} {
    %c0 = arith.constant 0 : index
    %c0_0 = arith.constant 0 : index
    %0 = vector.load %arg0[%c0, %c0_0] : memref<8x128xf32, #tpu.memory_space<vmem>>, vector<8x128xf32>
    %c1_i32 = arith.constant 1 : i32
    %1 = tpu.dynamic_rotate %0 by %c1_i32 dim 1 : vector<8x128xf32>, i32 -> vector<8x128xf32>
    %c0_1 = arith.constant 0 : index
    %c0_2 = arith.constant 0 : index
    %2 = vector.load %arg1[%c0_1, %c0_2] : memref<8x128xf32, #tpu.memory_space<vmem>>, vector<8x128xf32>
    tpu.vector_store %arg1[%c0_1, %c0_2], %1 {strides = array<i32>} : memref<8x128xf32, #tpu.memory_space<vmem>>, vector<8x128xf32>,
    return
  }
}

</mosaic_0001>

<llo_original>
// kernel: tpu_custom_call.1
$region0: #{tpu_custom_call.1}
  #allocation0 [shape = 'u32[]', space=smem, size = 0x4, offset = 0x4, fixed_abs, tag = 'smem constant byte address 0x4 - core index']
  #allocation1 [shape = 'u32[144,128]{1,0:T(1,128)}', space=vmem, size = 0x12000, scoped, tag = 'internal scratch']
  %s0 = inlined_call_operand.hbm [shape: f32[8,128], index: 0, kind: input, shape index: {}]
  %s1 = inlined_call_operand.hbm [shape: f32[8,128], index: 1, kind: output, shape index: {}]
  %s2 = sld [smem:[#allocation0]]
  $region18: #{tpu_custom_call.1} parent=0
    _
  %s4 = ssub.s32 1, %s2
  %s5 = scalar_select 0, %s4, %s2
  $region1: #{tpu_custom_call.1} parent=0
    #allocation2 [shape = 'u8[4096]{0}', space=vmem, size = 0x1000, scoped, tag = 'input window, operand 0, single buffered']
    #allocation3 [shape = 's32[1]{0}', space=sflag, size = 0x4, scoped, tag = 'scoped memory for tpu_custom_call.1']
    #allocation4 [shape = 's32[1]{0}', space=sflag, size = 0x4, scoped, tag = 'scoped memory for tpu_custom_call.1']
    #allocation5 [shape = 'u8[4096]{0}', space=vmem, size = 0x1000, scoped, tag = 'output window, operand 0, single buffered']
    %6 = vsyncpa [#allocation3], 0
    %7 = vsyncpa [#allocation4], 0
    // Predicated region
    $region2: #{tpu_custom_call.1} parent=1 // pred_check
      _
    $region3: #{tpu_custom_call.1} parent=1 // pred_check_branch
      %9 = sbr.rel (0) target = $region5
    $region4: #{tpu_custom_call.1} parent=1 // pred_region
      %s11 = ssub.s32 128, 128
      %12 = vsyncadd [#allocation3], %s11
      %s14 = sshll.u32 [#allocation2], 4
      %s15 = int_to_ptr.vmem [resolvable:$true] %s14
      %17 = dma.hbm_to_vmem [thread:$0]  %s0, 128, %s15, [#allocation3]
    $region5: #{tpu_custom_call.1} parent=1 // pred_fallthru
      _
    // Predicated region
    $region6: #{tpu_custom_call.1} parent=1 // pred_check
      _
    $region7: #{tpu_custom_call.1} parent=1 // pred_check_branch
      %19 = sbr.rel (0) target = $region9
    $region8: #{tpu_custom_call.1} parent=1 // pred_region
      %20 = dma.done [#allocation3], 128
    $region9: #{tpu_custom_call.1} parent=1 // pred_fallthru
      _
    %v21 = vld [vmem:[#allocation2] sm:$0xff]
    %22 = vrot.lane.b32.xlu0 %v21, 1
    %v23 = vpop.permute.xlu0 %22
    %24 = vst [vmem:[#allocation5] sm:$0xff] %v23
    // Predicated region
    $region10: #{tpu_custom_call.1} parent=1 // pred_check
      _
    $region11: #{tpu_custom_call.1} parent=1 // pred_check_branch
      %26 = sbr.rel (0) target = $region13
    $region12: #{tpu_custom_call.1} parent=1 // pred_region
      %s28 = ssub.s32 128, 128
      %29 = vsyncadd [#allocation4], %s28
      %s31 = sshll.u32 [#allocation5], 4
      %s32 = int_to_ptr.vmem [resolvable:$true] %s31
      %34 = dma.vmem_to_hbm [thread:$0]  %s32, 128, %s1, [#allocation4]
    $region13: #{tpu_custom_call.1} parent=1 // pred_fallthru
      _
    // Predicated region
    $region14: #{tpu_custom_call.1} parent=1 // pred_check
      _
    $region15: #{tpu_custom_call.1} parent=1 // pred_check_branch
      %36 = sbr.rel (0) target = $region17
    $region16: #{tpu_custom_call.1} parent=1 // pred_region
      %37 = dma.done [#allocation4], 128
    $region17: #{tpu_custom_call.1} parent=1 // pred_fallthru
      _
    %38 = vsyncpa [#allocation3], 1
    %39 = vsyncpa [#allocation4], 1

</llo_original>
